<compile_context>
chip_gen: v6e
topology: v6e:2x2x1
jax: 0.10.0
libtpu: 0.0.40
codegen_flags: <defaults>
</compile_context>

<pallas_src>
import functools

import jax
import jax.numpy as jnp
from jax.experimental import pallas as pl
from jax.experimental.pallas import tpu as pltpu

HIDDEN = 128
LANE = 128
NEG_BIG = -1e30  # bias for padded action lanes -> exp() == 0 exactly


def actor_kernel(x_ref, w1_ref, b1_ref, w2_ref, b2_ref, w3_ref, b3_ref, out_ref):
    # MXU operands in bf16, f32 accumulation; activations kept f32 so
    # ReLU / exp / reciprocal stay single-pass VPU/EUP ops (v5e has no bf16
    # VPU/EUP path).
    x = x_ref[...].astype(jnp.bfloat16)

    h1 = jnp.dot(x, w1_ref[...], preferred_element_type=jnp.float32) + b1_ref[...]
    h1 = jnp.maximum(h1, 0.0)

    h2 = jnp.dot(h1.astype(jnp.bfloat16), w2_ref[...],
                 preferred_element_type=jnp.float32) + b2_ref[...]
    h2 = jnp.maximum(h2, 0.0)

    logits = jnp.dot(h2.astype(jnp.bfloat16), w3_ref[...],
                     preferred_element_type=jnp.float32) + b3_ref[...]

    # Numerically-stable softmax over the last axis. Padded action lanes carry
    # a -1e30 bias and zero weights, so exp() there is exactly 0 and the real
    # lanes' softmax is unchanged.
    logits = logits - jnp.max(logits, axis=-1, keepdims=True)
    e = jnp.exp(logits)
    denom = jnp.sum(e, axis=-1, keepdims=True)
    out_ref[...] = e * pl.reciprocal(denom, approx=True)


def _round_up(x, m):
    return (x + m - 1) // m * m


def _choose_batch_tile(batch):
    # >=256 rows fills the 2x256x256 MXU M dimension on v6e/v7x and amortizes
    # the resident weight push; cap keeps the per-tile working set far below
    # v7x's 64 MiB VMEM (and leaves room for double buffering).
    if batch >= 256:
        return 256
    return _round_up(max(batch, 1), 8)


def prepare_params(params):
    """One-time prep: cast weights to bf16, lane-pad actor head to 128 cols."""
    w1, b1, w2, b2, w3, b3 = params
    action_size = w3.shape[1]
    a_pad = _round_up(action_size, LANE)

    w3p = jnp.zeros((w3.shape[0], a_pad), jnp.float32).at[:, :action_size].set(w3)
    b3p = jnp.full((1, a_pad), NEG_BIG, jnp.float32).at[:, :action_size].set(b3)

    return (w1.astype(jnp.bfloat16), b1.astype(jnp.float32),
            w2.astype(jnp.bfloat16), b2.astype(jnp.float32),
            w3p.astype(jnp.bfloat16), b3p.astype(jnp.float32))


@functools.partial(jax.jit, static_argnames=("action_size",))
def actor_network_forward(state, prepared, action_size):
    """state: (batch, state_size) f32. prepared: output of prepare_params."""
    w1, b1, w2, b2, w3, b3 = prepared
    batch, state_size = state.shape
    hidden = w1.shape[1]
    a_pad = w3.shape[1]

    tb = _choose_batch_tile(batch)
    padded_batch = _round_up(batch, tb)
    if padded_batch != batch:
        state = jnp.pad(state, ((0, padded_batch - batch), (0, 0)))

    grid = (padded_batch // tb,)

    def resident(shape):
        # Weights/biases: same block every grid step -> stay VMEM-resident.
        return pl.BlockSpec(shape, lambda i: (0,) * len(shape))

    flops = 2 * padded_batch * (state_size * hidden + hidden * hidden + hidden * a_pad)
    bytes_accessed = (
        padded_batch * state_size * 4
        + sum(int(a.size) * a.dtype.itemsize for a in prepared)
        + padded_batch * a_pad * 4
    )

    out = pl.pallas_call(
        actor_kernel,
        out_shape=jax.ShapeDtypeStruct((padded_batch, a_pad), jnp.float32),
        grid=grid,
        in_specs=[
            pl.BlockSpec((tb, state_size), lambda i: (i, 0)),
            resident(w1.shape), resident(b1.shape),
            resident(w2.shape), resident(b2.shape),
            resident(w3.shape), resident(b3.shape),
        ],
        out_specs=pl.BlockSpec((tb, a_pad), lambda i: (i, 0)),
        compiler_params=pltpu.CompilerParams(
            dimension_semantics=("parallel",),
            vmem_limit_bytes=32 * 1024 * 1024,
        ),
        cost_estimate=pl.CostEstimate(
            flops=flops,
            transcendentals=padded_batch * a_pad,
            bytes_accessed=bytes_accessed,
        ),
    )(state, w1, b1, w2, b2, w3, b3)

    # Slice away batch padding and the lane-padded action columns.
    return out[:batch, :action_size]


def init_params(key, state_size, action_size, hidden=HIDDEN):
    """PyTorch nn.Linear-style init: U[-1/sqrt(fan_in), 1/sqrt(fan_in)]."""
    ks = jax.random.split(key, 6)

    def linear(kw, kb, fan_in, fan_out):
        bound = 1.0 / jnp.sqrt(jnp.float32(fan_in))
        w = jax.random.uniform(kw, (fan_in, fan_out), jnp.float32, -bound, bound)
        b = jax.random.uniform(kb, (1, fan_out), jnp.float32, -bound, bound)
        return w, b

    w1, b1 = linear(ks[0], ks[1], state_size, hidden)
    w2, b2 = linear(ks[2], ks[3], hidden, hidden)
    w3, b3 = linear(ks[4], ks[5], hidden, action_size)
    return (w1, b1, w2, b2, w3, b3)


if __name__ == "__main__":
    key = jax.random.PRNGKey(0)
    k_state, k_params = jax.random.split(key)

    batch = 2
    state_size = 32
    action_size = 8

    state = jax.random.normal(k_state, (batch, state_size), jnp.float32)
    raw_params = init_params(k_params, state_size, action_size)
    prepared = prepare_params(raw_params)

    # NOTE: if this is invoked per RL timestep with tiny batches, batch many
    # states into one call — the grid over the batch axis already amortizes
    # weight DMA and launch overhead across tiles.
    policy = actor_network_forward(state, prepared, action_size=action_size)
    policy = jax.block_until_ready(policy)

    assert policy.shape == (batch, action_size)
    # Softmax rows sum to ~1 (approx EUP reciprocal -> loose tolerance).
    assert jnp.allclose(jnp.sum(policy, axis=-1), 1.0, atol=5e-3)

    # Cross-check against a plain f32 JAX reference (kernel uses bf16 MXU
    # operands with f32 accumulation, so tolerance is bf16-level).
    w1, b1, w2, b2, w3, b3 = raw_params
    h1 = jnp.maximum(state @ w1 + b1, 0.0)
    h2 = jnp.maximum(h1 @ w2 + b2, 0.0)
    logits = h2 @ w3 + b3
    logits = logits - jnp.max(logits, axis=-1, keepdims=True)
    ref = jnp.exp(logits) / jnp.sum(jnp.exp(logits), axis=-1, keepdims=True)
    assert jnp.allclose(policy, ref, atol=2e-2), float(jnp.max(jnp.abs(policy - ref)))

    print("KERNEL_OK")
</pallas_src>

<mosaic_0001>
module attributes {stable_mosaic.version = 11 : i64} {
  func.func @actor_kernel(%arg0: i32, %arg1: memref<8x32xf32, #tpu.memory_space<vmem>>, %arg2: memref<32x128xbf16, #tpu.memory_space<vmem>>, %arg3: memref<1x128xf32, #tpu.memory_space<vmem>>, %arg4: memref<128x128xbf16, #tpu.memory_space<vmem>>, %arg5: memref<1x128xf32, #tpu.memory_space<vmem>>, %arg6: memref<128x128xbf16, #tpu.memory_space<vmem>>, %arg7: memref<1x128xf32, #tpu.memory_space<vmem>>, %arg8: memref<8x128xf32, #tpu.memory_space<vmem>>) attributes {dimension_semantics = [#tpu.dimension_semantics<parallel>], iteration_bounds = array<i64: 1>, scalar_prefetch = 0 : i64, scratch_operands = 0 : i64, tpu.core_type = #tpu.core_type<tc>, window_params = [{transform_indices = @transform_0, window_bounds = array<i64: 8, 32>}, {pipeline_mode = #tpu.pipeline_mode<synchronous>, transform_indices = @transform_1, window_bounds = array<i64: 32, 128>}, {pipeline_mode = #tpu.pipeline_mode<synchronous>, transform_indices = @transform_2, window_bounds = array<i64: 1, 128>}, {pipeline_mode = #tpu.pipeline_mode<synchronous>, transform_indices = @transform_3, window_bounds = array<i64: 128, 128>}, {pipeline_mode = #tpu.pipeline_mode<synchronous>, transform_indices = @transform_4, window_bounds = array<i64: 1, 128>}, {pipeline_mode = #tpu.pipeline_mode<synchronous>, transform_indices = @transform_5, window_bounds = array<i64: 128, 128>}, {pipeline_mode = #tpu.pipeline_mode<synchronous>, transform_indices = @transform_6, window_bounds = array<i64: 1, 128>}, {transform_indices = @transform_7, window_bounds = array<i64: 8, 128>}]} {
    %c0 = arith.constant 0 : index
    %c0_0 = arith.constant 0 : index
    %0 = vector.load %arg1[%c0, %c0_0] : memref<8x32xf32, #tpu.memory_space<vmem>>, vector<8x32xf32>
    %1 = arith.truncf %0 : vector<8x32xf32> to vector<8x32xbf16>
    %c0_1 = arith.constant 0 : index
    %c0_2 = arith.constant 0 : index
    %2 = vector.load %arg2[%c0_1, %c0_2] : memref<32x128xbf16, #tpu.memory_space<vmem>>, vector<32x128xbf16>
    %cst = arith.constant dense<0.000000e+00> : vector<8x128xf32>
    %3 = tpu.matmul %1, %2, %cst {dimension_numbers = #tpu.dot_dimension_numbers<[1], [0], [0], [1], [0, 0, 1, 1], [], []>} : vector<8x32xbf16>, vector<32x128xbf16>, vector<8x128xf32> -> vector<8x128xf32>
    %c0_3 = arith.constant 0 : index
    %c0_4 = arith.constant 0 : index
    %4 = vector.load %arg3[%c0_3, %c0_4] : memref<1x128xf32, #tpu.memory_space<vmem>>, vector<1x128xf32>
    %5 = vector.broadcast %4 : vector<1x128xf32> to vector<8x128xf32>
    %6 = arith.addf %3, %5 : vector<8x128xf32>
    %cst_5 = arith.constant 0.000000e+00 : f32
    %7 = vector.broadcast %cst_5 : f32 to vector<8x128xf32>
    %8 = arith.maximumf %6, %7 : vector<8x128xf32>
    %9 = arith.truncf %8 : vector<8x128xf32> to vector<8x128xbf16>
    %c0_6 = arith.constant 0 : index
    %c0_7 = arith.constant 0 : index
    %10 = vector.load %arg4[%c0_6, %c0_7] : memref<128x128xbf16, #tpu.memory_space<vmem>>, vector<128x128xbf16>
    %cst_8 = arith.constant dense<0.000000e+00> : vector<8x128xf32>
    %11 = tpu.matmul %9, %10, %cst_8 {dimension_numbers = #tpu.dot_dimension_numbers<[1], [0], [0], [1], [0, 0, 1, 1], [], []>} : vector<8x128xbf16>, vector<128x128xbf16>, vector<8x128xf32> -> vector<8x128xf32>
    %c0_9 = arith.constant 0 : index
    %c0_10 = arith.constant 0 : index
    %12 = vector.load %arg5[%c0_9, %c0_10] : memref<1x128xf32, #tpu.memory_space<vmem>>, vector<1x128xf32>
    %13 = vector.broadcast %12 : vector<1x128xf32> to vector<8x128xf32>
    %14 = arith.addf %11, %13 : vector<8x128xf32>
    %cst_11 = arith.constant 0.000000e+00 : f32
    %15 = vector.broadcast %cst_11 : f32 to vector<8x128xf32>
    %16 = arith.maximumf %14, %15 : vector<8x128xf32>
    %17 = arith.truncf %16 : vector<8x128xf32> to vector<8x128xbf16>
    %c0_12 = arith.constant 0 : index
    %c0_13 = arith.constant 0 : index
    %18 = vector.load %arg6[%c0_12, %c0_13] : memref<128x128xbf16, #tpu.memory_space<vmem>>, vector<128x128xbf16>
    %cst_14 = arith.constant dense<0.000000e+00> : vector<8x128xf32>
    %19 = tpu.matmul %17, %18, %cst_14 {dimension_numbers = #tpu.dot_dimension_numbers<[1], [0], [0], [1], [0, 0, 1, 1], [], []>} : vector<8x128xbf16>, vector<128x128xbf16>, vector<8x128xf32> -> vector<8x128xf32>
    %c0_15 = arith.constant 0 : index
    %c0_16 = arith.constant 0 : index
    %20 = vector.load %arg7[%c0_15, %c0_16] : memref<1x128xf32, #tpu.memory_space<vmem>>, vector<1x128xf32>
    %21 = vector.broadcast %20 : vector<1x128xf32> to vector<8x128xf32>
    %22 = arith.addf %19, %21 : vector<8x128xf32>
    %cst_17 = arith.constant dense<0xFF800000> : vector<8xf32>
    %23 = vector.multi_reduction <maximumf>, %22, %cst_17 [1] : vector<8x128xf32> to vector<8xf32>
    %24 = vector.shape_cast %23 : vector<8xf32> to vector<8x1xf32>
    %25 = vector.broadcast %24 : vector<8x1xf32> to vector<8x128xf32>
    %26 = arith.subf %22, %25 : vector<8x128xf32>
    %27 = math.exp %26 : vector<8x128xf32>
    %cst_18 = arith.constant dense<0.000000e+00> : vector<8xf32>
    %28 = vector.multi_reduction <add>, %27, %cst_18 [1] : vector<8x128xf32> to vector<8xf32>
    %29 = vector.shape_cast %28 : vector<8xf32> to vector<8x1xf32>
    %30 = tpu.reciprocal %29 {approx = true} : vector<8x1xf32> -> vector<8x1xf32>
    %31 = vector.broadcast %30 : vector<8x1xf32> to vector<8x128xf32>
    %32 = arith.mulf %27, %31 : vector<8x128xf32>
    %c0_19 = arith.constant 0 : index
    %c0_20 = arith.constant 0 : index
    %33 = vector.load %arg8[%c0_19, %c0_20] : memref<8x128xf32, #tpu.memory_space<vmem>>, vector<8x128xf32>
    tpu.vector_store %arg8[%c0_19, %c0_20], %32 {strides = array<i32>} : memref<8x128xf32, #tpu.memory_space<vmem>>, vector<8x128xf32>,
    return
  }
  func.func @transform_0(%arg0: i32) -> (i32, i32) {
    %c0_i32 = arith.constant 0 : i32
    %c0_i32_0 = arith.constant 0 : i32
    return %arg0, %c0_i32 : i32, i32
  }
  func.func @transform_1(%arg0: i32) -> (i32, i32) {
    %c0_i32 = arith.constant 0 : i32
    %c0_i32_0 = arith.constant 0 : i32
    %c0_i32_1 = arith.constant 0 : i32
    return %c0_i32, %c0_i32_0 : i32, i32
  }
  func.func @transform_2(%arg0: i32) -> (i32, i32) {
    %c0_i32 = arith.constant 0 : i32
    %c0_i32_0 = arith.constant 0 : i32
    %c0_i32_1 = arith.constant 0 : i32
    return %c0_i32, %c0_i32_0 : i32, i32
  }
  func.func @transform_3(%arg0: i32) -> (i32, i32) {
    %c0_i32 = arith.constant 0 : i32
    %c0_i32_0 = arith.constant 0 : i32
    %c0_i32_1 = arith.constant 0 : i32
    return %c0_i32, %c0_i32_0 : i32, i32
  }
  func.func @transform_4(%arg0: i32) -> (i32, i32) {
    %c0_i32 = arith.constant 0 : i32
    %c0_i32_0 = arith.constant 0 : i32
    %c0_i32_1 = arith.constant 0 : i32
    return %c0_i32, %c0_i32_0 : i32, i32
  }
  func.func @transform_5(%arg0: i32) -> (i32, i32) {
    %c0_i32 = arith.constant 0 : i32
    %c0_i32_0 = arith.constant 0 : i32
    %c0_i32_1 = arith.constant 0 : i32
    return %c0_i32, %c0_i32_0 : i32, i32
  }
  func.func @transform_6(%arg0: i32) -> (i32, i32) {
    %c0_i32 = arith.constant 0 : i32
    %c0_i32_0 = arith.constant 0 : i32
    %c0_i32_1 = arith.constant 0 : i32
    return %c0_i32, %c0_i32_0 : i32, i32
  }
  func.func @transform_7(%arg0: i32) -> (i32, i32) {
    %c0_i32 = arith.constant 0 : i32
    %c0_i32_0 = arith.constant 0 : i32
    return %arg0, %c0_i32 : i32, i32
  }
}

</mosaic_0001>

<llo_original>
// kernel: actor_network_forward.1
$region0: #{actor_network_forward.1}
  #allocation0 [shape = 'u32[]', space=smem, size = 0x4, offset = 0x4, fixed_abs, tag = 'smem constant byte address 0x4 - core index']
  #allocation1 [shape = 'u32[144,128]{1,0:T(1,128)}', space=vmem, size = 0x12000, scoped, tag = 'internal scratch']
  %s0 = inlined_call_operand.vmem [shape: f32[8,32], index: 0, kind: input, shape index: {}]
  %s1 = inlined_call_operand.hbm [shape: bf16[32,128], index: 1, kind: input, shape index: {}]
  %s2 = inlined_call_operand.vmem [shape: f32[1,128], index: 2, kind: input, shape index: {}]
  %s3 = inlined_call_operand.hbm [shape: bf16[128,128], index: 3, kind: input, shape index: {}]
  %s4 = inlined_call_operand.vmem [shape: f32[1,128], index: 4, kind: input, shape index: {}]
  %s5 = inlined_call_operand.hbm [shape: bf16[128,128], index: 5, kind: input, shape index: {}]
  %s6 = inlined_call_operand.vmem [shape: f32[1,128], index: 6, kind: input, shape index: {}]
  %s7 = inlined_call_operand.vmem [shape: f32[8,128], index: 7, kind: output, shape index: {}]
  %s8 = sld [smem:[#allocation0]]
  $region50: #{actor_network_forward.1} parent=0
    _
  %s10 = ssub.s32 1, %s8
  %s11 = scalar_select 0, %s10, %s8
  $region1: #{actor_network_forward.1} parent=0
    #allocation2 [shape = 'u8[8192]{0}', space=vmem, size = 0x2000, scoped, tag = 'input window, operand 1, single buffered']
    #allocation3 [shape = 's32[1]{0}', space=sflag, size = 0x4, scoped, tag = 'scoped memory for actor_network_forward.1']
    #allocation4 [shape = 'u8[32768]{0}', space=vmem, size = 0x8000, scoped, tag = 'input window, operand 3, single buffered']
    #allocation5 [shape = 's32[1]{0}', space=sflag, size = 0x4, scoped, tag = 'scoped memory for actor_network_forward.1']
    #allocation6 [shape = 'u8[32768]{0}', space=vmem, size = 0x8000, scoped, tag = 'input window, operand 5, single buffered']
    %12 = vsyncpa [#allocation3], 0
    %13 = vsyncpa [#allocation5], 0
    // Predicated region
    $region2: #{actor_network_forward.1} parent=1 // pred_check
      _
    $region3: #{actor_network_forward.1} parent=1 // pred_check_branch
      %15 = sbr.rel (0) target = $region5
    $region4: #{actor_network_forward.1} parent=1 // pred_region
      _
    $region5: #{actor_network_forward.1} parent=1 // pred_fallthru
      _
    // Predicated region
    $region6: #{actor_network_forward.1} parent=1 // pred_check
      _
    $region7: #{actor_network_forward.1} parent=1 // pred_check_branch
      %17 = sbr.rel (0) target = $region9
    $region8: #{actor_network_forward.1} parent=1 // pred_region
      %s19 = ssub.s32 256, 256
      %20 = vsyncadd [#allocation3], %s19
      %s21 = sshll.u32 [#allocation2], 4
      %s22 = int_to_ptr.vmem [resolvable:$true] %s21
      %27 = dma.hbm_to_vmem [thread:$0]  %s1, 256, %s22, [#allocation3], 64, 64, 4
    $region9: #{actor_network_forward.1} parent=1 // pred_fallthru
      _
    // Predicated region
    $region10: #{actor_network_forward.1} parent=1 // pred_check
      _
    $region11: #{actor_network_forward.1} parent=1 // pred_check_branch
      %29 = sbr.rel (0) target = $region13
    $region12: #{actor_network_forward.1} parent=1 // pred_region
      _
    $region13: #{actor_network_forward.1} parent=1 // pred_fallthru
      _
    // Predicated region
    $region14: #{actor_network_forward.1} parent=1 // pred_check
      _
    $region15: #{actor_network_forward.1} parent=1 // pred_check_branch
      %31 = sbr.rel (0) target = $region17
    $region16: #{actor_network_forward.1} parent=1 // pred_region
      %s33 = ssub.s32 1024, 1024
      %34 = vsyncadd [#allocation5], %s33
      %s35 = sshll.u32 [#allocation4], 4
      %s36 = int_to_ptr.vmem [resolvable:$true] %s35
      %41 = dma.hbm_to_vmem [thread:$0]  %s3, 1024, %s36, [#allocation5], 64, 64, 4
    $region17: #{actor_network_forward.1} parent=1 // pred_fallthru
      _
    // Predicated region
    $region18: #{actor_network_forward.1} parent=1 // pred_check
      _
    $region19: #{actor_network_forward.1} parent=1 // pred_check_branch
      %43 = sbr.rel (0) target = $region21
    $region20: #{actor_network_forward.1} parent=1 // pred_region
      _
    $region21: #{actor_network_forward.1} parent=1 // pred_fallthru
      _
    // Predicated region
    $region22: #{actor_network_forward.1} parent=1 // pred_check
      _
    $region23: #{actor_network_forward.1} parent=1 // pred_check_branch
      %45 = sbr.rel (0) target = $region25
    $region24: #{actor_network_forward.1} parent=1 // pred_region
      %s47 = ssub.s32 1024, 1024
      %48 = vsyncadd [#allocation5], %s47
      %s49 = sshll.u32 [#allocation6], 4
      %s50 = int_to_ptr.vmem [resolvable:$true] %s49
      %55 = dma.hbm_to_vmem [thread:$0]  %s5, 1024, %s50, [#allocation5], 64, 64, 4
    $region25: #{actor_network_forward.1} parent=1 // pred_fallthru
      _
    // Predicated region
    $region26: #{actor_network_forward.1} parent=1 // pred_check
      _
    $region27: #{actor_network_forward.1} parent=1 // pred_check_branch
      %57 = sbr.rel (0) target = $region29
    $region28: #{actor_network_forward.1} parent=1 // pred_region
      _
    $region29: #{actor_network_forward.1} parent=1 // pred_fallthru
      _
    // Predicated region
    $region30: #{actor_network_forward.1} parent=1 // pred_check
      _
    $region31: #{actor_network_forward.1} parent=1 // pred_check_branch
      %59 = sbr.rel (0) target = $region33
    $region32: #{actor_network_forward.1} parent=1 // pred_region
      %60 = dma.done [#allocation3], 256
    $region33: #{actor_network_forward.1} parent=1 // pred_fallthru
      _
    // Predicated region
    $region34: #{actor_network_forward.1} parent=1 // pred_check
      _
    $region35: #{actor_network_forward.1} parent=1 // pred_check_branch
      %62 = sbr.rel (0) target = $region37
    $region36: #{actor_network_forward.1} parent=1 // pred_region
      %63 = dma.done [#allocation5], 1024
    $region37: #{actor_network_forward.1} parent=1 // pred_fallthru
      _
    // Predicated region
    $region38: #{actor_network_forward.1} parent=1 // pred_check
      _
    $region39: #{actor_network_forward.1} parent=1 // pred_check_branch
      %65 = sbr.rel (0) target = $region41
    $region40: #{actor_network_forward.1} parent=1 // pred_region
      %66 = dma.done [#allocation5], 1024
    $region41: #{actor_network_forward.1} parent=1 // pred_fallthru
      _
    %v68 = vld [vmem:[%s0] sm:$0xff]
    %v69 = vpack.c.bf16 %v68, %v68
    %v70 = vld [vmem:[#allocation2] sm:$0xf]
    %v71 = vld [vmem:[#allocation2 + $0x4] sm:$0xf]
    %v72 = vld [vmem:[#allocation2 + $0x8] sm:$0xf]
    %v73 = vld [vmem:[#allocation2 + $0xc] sm:$0xf]
    %v74 = vld [vmem:[%s2] sm:$0x1]
    %v76 = vlaneseq
    %v77 = vshrl.u32 %v76, 7
    %v78 = vsub.s32 0, %v77
    %v79 = vrot.slane %v74, %v78
    %v85 = vunpack.c.l.b16 %v70
    %v86 = vunpack.c.l.b16 %v71
    %v87 = vunpack.c.l.b16 %v72
    %v88 = vunpack.c.l.b16 %v73
    %v89 = vpack.c.b16 %v86, %v85
    %v90 = vpack.c.b16 %v88, %v87
    %vm93 = vcmask 261120
    %v95 = vsel %vm93, %v69, 0
    %97 = vmatprep.subr.bf16.mxu0 0
    %98 = vmatpush1.bf16.msra.mxu0 0
    %99 = vmatprep.subr.bf16.mxu0 0
    %100 = vmatpush1.bf16.msra.mxu0 0
    %101 = vmatprep.subr.bf16.mxu0 0
    %102 = vmatpush1.bf16.msra.mxu0 0
    %103 = vmatprep.subr.bf16.mxu0 0
    %104 = vmatpush1.bf16.msra.mxu0 0
    %105 = vmatprep.subr.bf16.mxu0 0
    %106 = vmatpush1.bf16.msra.mxu0 0
    %107 = vmatprep.subr.bf16.mxu0 0
    %108 = vmatpush1.bf16.msra.mxu0 0
    %109 = vmatprep.subr.bf16.mxu0 0
    %110 = vmatpush1.bf16.msra.mxu0 %v90
    %111 = vmatprep.subr.bf16.mxu0 0
    %112 = vmatpush1.bf16.msra.mxu0 %v89
    %113 = vmatprep.subr.bf16.mxu0 0
    %114 = vmatpush2.bf16.msra.mxu0 0
    %115 = vmatprep.subr.bf16.mxu0 0
    %116 = vmatpush2.bf16.msra.mxu0 0
    %117 = vmatprep.subr.bf16.mxu0 0
    %118 = vmatpush2.bf16.msra.mxu0 0
    %119 = vmatprep.subr.bf16.mxu0 0
    %120 = vmatpush2.bf16.msra.mxu0 0
    %121 = vmatprep.subr.bf16.mxu0 0
    %122 = vmatpush2.bf16.msra.mxu0 0
    %123 = vmatprep.subr.bf16.mxu0 0
    %124 = vmatpush2.bf16.msra.mxu0 0
    %125 = vmatprep.subr.bf16.mxu0 0
    %126 = vmatpush2.bf16.msra.mxu0 0
    %127 = vmatprep.subr.bf16.mxu0 0
    %128 = vmatpush2.bf16.msra.mxu0 0
    %129 = vmatprep.mubr.bf16.mxu0 0
    %130 = vmatmul.mubr.bf16.gmra.mxu0 %v95
    %v131 = vpop.f32.mrf.mxu0
    %v132 = vadd.f32 %v79, %v131
    %v133 = vpop.f32.mrf.mxu0
    %v134 = vpop.f32.mrf.mxu0
    %v135 = vpop.f32.mrf.mxu0
    %136 = vdwg.mxu0
    %v137 = vmax.f32 %v132, 0.0
    %v138 = vpack.c.bf16 %v137, %v137
    %v139 = vld [vmem:[#allocation4] sm:$0xf]
    %v140 = vld [vmem:[#allocation4 + $0x4] sm:$0xf]
    %v141 = vld [vmem:[#allocation4 + $0x8] sm:$0xf]
    %v142 = vld [vmem:[#allocation4 + $0xc] sm:$0xf]
    %v143 = vld [vmem:[#allocation4 + $0x10] sm:$0xf]
    %v144 = vld [vmem:[#allocation4 + $0x14] sm:$0xf]
    %v145 = vld [vmem:[#allocation4 + $0x18] sm:$0xf]
    %v146 = vld [vmem:[#allocation4 + $0x1c] sm:$0xf]
    %v147 = vld [vmem:[#allocation4 + $0x20] sm:$0xf]
    %v148 = vld [vmem:[#allocation4 + $0x24] sm:$0xf]
    %v149 = vld [vmem:[#allocation4 + $0x28] sm:$0xf]
    %v150 = vld [vmem:[#allocation4 + $0x2c] sm:$0xf]
    %v151 = vld [vmem:[#allocation4 + $0x30] sm:$0xf]
    %v152 = vld [vmem:[#allocation4 + $0x34] sm:$0xf]
    %v153 = vld [vmem:[#allocation4 + $0x38] sm:$0xf]
    %v154 = vld [vmem:[#allocation4 + $0x3c] sm:$0xf]
    %v155 = vld [vmem:[%s4] sm:$0x1]
    %v157 = vlaneseq
    %v158 = vshrl.u32 %v157, 7
    %v159 = vsub.s32 0, %v158
    %v160 = vrot.slane %v155, %v159
    %v178 = vunpack.c.l.b16 %v139
    %v179 = vunpack.c.l.b16 %v140
    %v180 = vunpack.c.l.b16 %v141
    %v181 = vunpack.c.l.b16 %v142
    %v182 = vunpack.c.l.b16 %v143
    %v183 = vunpack.c.l.b16 %v144
    %v184 = vunpack.c.l.b16 %v145
    %v185 = vunpack.c.l.b16 %v146
    %v186 = vunpack.c.l.b16 %v147
    %v187 = vunpack.c.l.b16 %v148
    %v188 = vunpack.c.l.b16 %v149
    %v189 = vunpack.c.l.b16 %v150
    %v190 = vunpack.c.l.b16 %v151
    %v191 = vunpack.c.l.b16 %v152
    %v192 = vunpack.c.l.b16 %v153
    %v193 = vunpack.c.l.b16 %v154
    %v194 = vpack.c.b16 %v179, %v178
    %v195 = vpack.c.b16 %v181, %v180
    %v196 = vpack.c.b16 %v183, %v182
    %v197 = vpack.c.b16 %v185, %v184
    %v198 = vpack.c.b16 %v187, %v186
    %v199 = vpack.c.b16 %v189, %v188
    %v200 = vpack.c.b16 %v191, %v190
    %v201 = vpack.c.b16 %v193, %v192
    %210 = vmatprep.subr.bf16.mxu0 0
    %211 = vmatpush1.bf16.msra.mxu0 %v201
    %212 = vmatprep.subr.bf16.mxu0 0
    %213 = vmatpush1.bf16.msra.mxu0 %v200
    %214 = vmatprep.subr.bf16.mxu0 0
    %215 = vmatpush1.bf16.msra.mxu0 %v199
    %216 = vmatprep.subr.bf16.mxu0 0
    %217 = vmatpush1.bf16.msra.mxu0 %v198
    %218 = vmatprep.subr.bf16.mxu0 0
    %219 = vmatpush1.bf16.msra.mxu0 %v197
    %220 = vmatprep.subr.bf16.mxu0 0
    %221 = vmatpush1.bf16.msra.mxu0 %v196
    %222 = vmatprep.subr.bf16.mxu0 0
    %223 = vmatpush1.bf16.msra.mxu0 %v195
    %224 = vmatprep.subr.bf16.mxu0 0
    %225 = vmatpush1.bf16.msra.mxu0 %v194
    %226 = vmatprep.subr.bf16.mxu0 0
    %227 = vmatpush2.bf16.msra.mxu0 0
    %228 = vmatprep.subr.bf16.mxu0 0
    %229 = vmatpush2.bf16.msra.mxu0 0
    %230 = vmatprep.subr.bf16.mxu0 0
    %231 = vmatpush2.bf16.msra.mxu0 0
    %232 = vmatprep.subr.bf16.mxu0 0
    %233 = vmatpush2.bf16.msra.mxu0 0
    %234 = vmatprep.subr.bf16.mxu0 0
    %235 = vmatpush2.bf16.msra.mxu0 0
    %236 = vmatprep.subr.bf16.mxu0 0
    %237 = vmatpush2.bf16.msra.mxu0 0
    %238 = vmatprep.subr.bf16.mxu0 0
    %239 = vmatpush2.bf16.msra.mxu0 0
    %240 = vmatprep.subr.bf16.mxu0 0
    %241 = vmatpush2.bf16.msra.mxu0 0
    %242 = vmatprep.mubr.bf16.mxu0 0
    %243 = vmatmul.mubr.bf16.gmra.mxu0 %v138
    %v244 = vpop.f32.mrf.mxu0
    %v245 = vadd.f32 %v160, %v244
    %v246 = vpop.f32.mrf.mxu0
    %v247 = vpop.f32.mrf.mxu0
    %v248 = vpop.f32.mrf.mxu0
    %249 = vdwg.mxu0
    %v250 = vmax.f32 %v245, 0.0
    %v251 = vpack.c.bf16 %v250, %v250
    %v252 = vld [vmem:[#allocation6] sm:$0xf]
    %v253 = vld [vmem:[#allocation6 + $0x4] sm:$0xf]
    %v254 = vld [vmem:[#allocation6 + $0x8] sm:$0xf]
    %v255 = vld [vmem:[#allocation6 + $0xc] sm:$0xf]
    %v256 = vld [vmem:[#allocation6 + $0x10] sm:$0xf]
    %v257 = vld [vmem:[#allocation6 + $0x14] sm:$0xf]
    %v258 = vld [vmem:[#allocation6 + $0x18] sm:$0xf]
    %v259 = vld [vmem:[#allocation6 + $0x1c] sm:$0xf]
    %v260 = vld [vmem:[#allocation6 + $0x20] sm:$0xf]
    %v261 = vld [vmem:[#allocation6 + $0x24] sm:$0xf]
    %v262 = vld [vmem:[#allocation6 + $0x28] sm:$0xf]
    %v263 = vld [vmem:[#allocation6 + $0x2c] sm:$0xf]
    %v264 = vld [vmem:[#allocation6 + $0x30] sm:$0xf]
    %v265 = vld [vmem:[#allocation6 + $0x34] sm:$0xf]
    %v266 = vld [vmem:[#allocation6 + $0x38] sm:$0xf]
    %v267 = vld [vmem:[#allocation6 + $0x3c] sm:$0xf]
    %v268 = vld [vmem:[%s6] sm:$0x1]
    %v270 = vlaneseq
    %v271 = vshrl.u32 %v270, 7
    %v272 = vsub.s32 0, %v271
    %v273 = vrot.slane %v268, %v272
    %v291 = vunpack.c.l.b16 %v252
    %v292 = vunpack.c.l.b16 %v253
    %v293 = vunpack.c.l.b16 %v254
    %v294 = vunpack.c.l.b16 %v255
    %v295 = vunpack.c.l.b16 %v256
    %v296 = vunpack.c.l.b16 %v257
    %v297 = vunpack.c.l.b16 %v258
    %v298 = vunpack.c.l.b16 %v259
    %v299 = vunpack.c.l.b16 %v260
    %v300 = vunpack.c.l.b16 %v261
    %v301 = vunpack.c.l.b16 %v262
    %v302 = vunpack.c.l.b16 %v263
    %v303 = vunpack.c.l.b16 %v264
    %v304 = vunpack.c.l.b16 %v265
    %v305 = vunpack.c.l.b16 %v266
    %v306 = vunpack.c.l.b16 %v267
    %v307 = vpack.c.b16 %v292, %v291
    %v308 = vpack.c.b16 %v294, %v293
    %v309 = vpack.c.b16 %v296, %v295
    %v310 = vpack.c.b16 %v298, %v297
    %v311 = vpack.c.b16 %v300, %v299
    %v312 = vpack.c.b16 %v302, %v301
    %v313 = vpack.c.b16 %v304, %v303
    %v314 = vpack.c.b16 %v306, %v305
    %323 = vmatprep.subr.bf16.mxu0 0
    %324 = vmatpush1.bf16.msra.mxu0 %v314
    %325 = vmatprep.subr.bf16.mxu0 0
    %326 = vmatpush1.bf16.msra.mxu0 %v313
    %327 = vmatprep.subr.bf16.mxu0 0
    %328 = vmatpush1.bf16.msra.mxu0 %v312
    %329 = vmatprep.subr.bf16.mxu0 0
    %330 = vmatpush1.bf16.msra.mxu0 %v311
    %331 = vmatprep.subr.bf16.mxu0 0
    %332 = vmatpush1.bf16.msra.mxu0 %v310
    %333 = vmatprep.subr.bf16.mxu0 0
    %334 = vmatpush1.bf16.msra.mxu0 %v309
    %335 = vmatprep.subr.bf16.mxu0 0
    %336 = vmatpush1.bf16.msra.mxu0 %v308
    %337 = vmatprep.subr.bf16.mxu0 0
    %338 = vmatpush1.bf16.msra.mxu0 %v307
    %339 = vmatprep.subr.bf16.mxu0 0
    %340 = vmatpush2.bf16.msra.mxu0 0
    %341 = vmatprep.subr.bf16.mxu0 0
    %342 = vmatpush2.bf16.msra.mxu0 0
    %343 = vmatprep.subr.bf16.mxu0 0
    %344 = vmatpush2.bf16.msra.mxu0 0
    %345 = vmatprep.subr.bf16.mxu0 0
    %346 = vmatpush2.bf16.msra.mxu0 0
    %347 = vmatprep.subr.bf16.mxu0 0
    %348 = vmatpush2.bf16.msra.mxu0 0
    %349 = vmatprep.subr.bf16.mxu0 0
    %350 = vmatpush2.bf16.msra.mxu0 0
    %351 = vmatprep.subr.bf16.mxu0 0
    %352 = vmatpush2.bf16.msra.mxu0 0
    %353 = vmatprep.subr.bf16.mxu0 0
    %354 = vmatpush2.bf16.msra.mxu0 0
    %355 = vmatprep.mubr.bf16.mxu0 0
    %356 = vmatmul.mubr.bf16.gmra.mxu0 %v251
    %v357 = vpop.f32.mrf.mxu0
    %v358 = vadd.f32 %v273, %v357
    %v359 = vpop.f32.mrf.mxu0
    %v360 = vpop.f32.mrf.mxu0
    %v361 = vpop.f32.mrf.mxu0
    %362 = vdwg.mxu0
    %363 = vmax.xlane.f32.xlu0 %v358
    %v364 = vpop.xlane.xlu0 %363
    %v365 = vsub.f32 %v358, %v364
    %v366 = vmul.f32 %v365, 1.442695
    %v367 = vpow.pop %v366
    %368 = vadd.xlane.f32.xlu0 %v367
    %v369 = vpop.xlane.xlu0 %368
    %v370 = vrcp.pop %v369
    %v371 = vmul.f32 %v367, %v370
    %372 = vst [vmem:[%s7] sm:$0xff] %v371
    // Predicated region
    $region42: #{actor_network_forward.1} parent=1 // pred_check
      _
    $region43: #{actor_network_forward.1} parent=1 // pred_check_branch
      %374 = sbr.rel (0) target = $region45
    $region44: #{actor_network_forward.1} parent=1 // pred_region
      _
    $region45: #{actor_network_forward.1} parent=1 // pred_fallthru
      _
    // Predicated region
    $region46: #{actor_network_forward.1} parent=1 // pred_check
      _
    $region47: #{actor_network_forward.1} parent=1 // pred_check_branch
      %376 = sbr.rel (0) target = $region49
    $region48: #{actor_network_forward.1} parent=1 // pred_region
      _
    $region49: #{actor_network_forward.1} parent=1 // pred_fallthru
      _
    %377 = vsyncpa [#allocation3], 1
    %378 = vsyncpa [#allocation5], 1

</llo_original>
